<compile_context>
chip_gen: v6e
topology: v6e:2x2x1
jax: 0.10.0
libtpu: 0.0.40
codegen_flags: <defaults>
</compile_context>

<pallas_src>
import functools

import numpy as np
import jax
import jax.numpy as jnp
from jax.experimental import pallas as pl
from jax.experimental.pallas import tpu as pltpu


def _shift_offsets(b_size):
    """Off-center shift offsets; column pass first, then row pass.

    The kernel consumes the hoisted border masks in exactly this order."""
    bh, bw = b_size
    ph, pw = bh // 2, bw // 2
    col_shifts = [d for d in range(-pw, bw - pw) if d != 0]
    row_shifts = [d for d in range(-ph, bh - ph) if d != 0]
    return col_shifts, row_shifts


def _build_border_masks(b_size, H, W):
    """(n_masks, 1, H*W) f32 0/1 masks, one per off-center shift (exact int math)."""
    col_shifts, row_shifts = _shift_offsets(b_size)
    HW = H * W
    lane = np.arange(HW, dtype=np.int64)
    row = lane // W
    col = lane % W
    masks = []
    for d in col_shifts:
        masks.append(((col + d >= 0) & (col + d <= W - 1)).astype(np.float32))
    for d in row_shifts:
        masks.append(((row + d >= 0) & (row + d <= H - 1)).astype(np.float32))
    if not masks:                       # 1x1 window: dummy row, never indexed
        masks.append(np.ones((HW,), np.float32))
    return np.stack(masks, axis=0).reshape(len(masks), 1, HW)


def _dn_kernel(mask_ref, x_ref, o_ref, *, b_type, b_size, sigma, H, W, c_real):
    """mask_ref: (n_masks, 1, HW); x_ref: (nb, C_pad, HW); o_ref: (nb, C, HW)."""
    if b_type not in ("linf", "l1", "l2"):
        raise NotImplementedError(b_type)
    HW = H * W
    is_max = (b_type == "linf")
    col_shifts, row_shifts = _shift_offsets(b_size)

    xf = x_ref[...].astype(jnp.float32)
    src = xf * xf if b_type == "l2" else jnp.abs(xf)
    # xf is not referenced after this point; the final multiply re-reads x_ref
    # so no extra f32 block copy stays live across the window pass.

    def combine(acc, t):
        return jnp.maximum(acc, t) if is_max else acc + t

    mask_idx = 0

    def shifted(a, flat_shift):
        # result[..., j] = a[..., j + flat_shift] where the window stays inside
        # the image, else 0 (the correct padding identity for sum, and for max
        # of non-negative values).  1 XLU roll + 1 VALU mul; mask (1, HW)
        # broadcasts over (nb, C).
        nonlocal mask_idx
        m = mask_ref[mask_idx]
        mask_idx += 1
        r = pltpu.roll(a, shift=(-flat_shift) % HW, axis=2)
        return r * m

    # Separable, zero-padded window reduction on the flattened spatial axis.
    rw = src
    for d in col_shifts:                       # column (W) pass
        rw = combine(rw, shifted(src, d))
    sf = rw
    for d in row_shifts:                       # row (H) pass (shift = d*W flat)
        sf = combine(sf, shifted(rw, d * W))
    if b_type == "l2":
        sf = jnp.sqrt(sf)

    # Per-image channel mean (zero-padded channels contribute 0; divide by the
    # real channel count) and global spatial max.
    sf_mean = jnp.sum(sf, axis=1, keepdims=True) * (1.0 / c_real)   # (nb,1,HW)
    gmax = jnp.max(sf_mean, axis=2, keepdims=True)                  # (nb,1,1)
    divisor = sigma * gmax + (1.0 - sigma) * sf_mean + 1e-07

    # H*W reciprocals on the EUP (free slot) + one Newton refinement, then a
    # broadcast multiply over channels instead of C*H*W divides.
    inv = pl.reciprocal(divisor, approx=True)
    inv = inv * (2.0 - divisor * inv)

    xo = x_ref[...]
    if xo.shape[1] != c_real:
        xo = xo[:, :c_real, :]
    o_ref[...] = (xo.astype(jnp.float32) * inv).astype(o_ref.dtype)


def _vmem_capacity_bytes(default_bytes=64 * 1024 * 1024):
    try:
        info = pltpu.get_tpu_info()
        return int(getattr(info, "vmem_capacity_bytes", default_bytes))
    except Exception:
        return default_bytes


def divisive_normalization_2d(x, b_type="linf", b_size=(3, 3), sigma=1.0,
                              alpha=0.0):
    """Pallas implementation of DivisiveNormalization2d.forward.

    x: (N, C, H, W) float array.  Returns (N, C, H, W).
    (`alpha` is stored by the torch module but unused in its forward.)
    """
    if isinstance(b_size, int):
        b_size = (b_size, b_size)
    N, C, H, W = x.shape
    HW = H * W

    # Lane-dense layout: flatten spatial dims (free, contiguous reshape).
    x_flat = jnp.reshape(x, (N, C, HW))

    # Pad C to a multiple of 8 sublanes so the window pass uses full vregs.
    # Zero channels are harmless (sum divides by real C; max is over >=0
    # values) and only the real C channels are written out.
    c_pad = ((C + 7) // 8) * 8
    if c_pad != C:
        x_flat = jnp.pad(x_flat, ((0, 0), (0, c_pad - C), (0, 0)))

    # Hoisted border masks (depend only on lane position).
    masks = jnp.asarray(_build_border_masks(b_size, H, W))
    n_mask_rows = masks.shape[0]

    # Images per grid step, sized against the *real* VMEM working set
    # (double-buffered in+out blocks plus live f32 intermediates), capped so
    # it fits v5e's 16 MiB default scoped VMEM with headroom, while keeping
    # >= 4 grid steps when N allows so each v7x TensorCore gets >= 2
    # pipelined steps (and a single-core chip still overlaps DMA/compute).
    itemsize = jnp.dtype(x.dtype).itemsize
    per_img_bytes = (2 * c_pad * HW * itemsize        # double-buffered input
                     + 2 * C * HW * itemsize          # double-buffered output
                     + 5 * c_pad * HW * 4)            # live f32 intermediates
    mask_bytes = 2 * n_mask_rows * HW * 4
    working_set_budget = 12 * 1024 * 1024
    min_steps = 4
    max_nb = max(1, N // min_steps)
    nb = 1
    for cand in range(2, N + 1):
        if (N % cand == 0 and cand <= max_nb
                and cand * per_img_bytes + mask_bytes <= working_set_budget):
            nb = cand
    grid = (N // nb,)

    vmem_cap = _vmem_capacity_bytes()
    vmem_limit = int(min(vmem_cap // 2, 64 * 1024 * 1024))

    kernel = functools.partial(
        _dn_kernel, b_type=b_type, b_size=b_size, sigma=float(sigma),
        H=H, W=W, c_real=C)

    out = pl.pallas_call(
        kernel,
        out_shape=jax.ShapeDtypeStruct((N, C, HW), x.dtype),
        grid_spec=pltpu.PrefetchScalarGridSpec(
            num_scalar_prefetch=0,
            grid=grid,
            in_specs=[
                pl.BlockSpec((n_mask_rows, 1, HW), lambda i: (0, 0, 0)),
                pl.BlockSpec((nb, c_pad, HW), lambda i: (i, 0, 0)),
            ],
            out_specs=pl.BlockSpec((nb, C, HW), lambda i: (i, 0, 0)),
        ),
        compiler_params=pltpu.CompilerParams(
            dimension_semantics=("parallel",),
            vmem_limit_bytes=vmem_limit),
    )(masks, x_flat)

    return jnp.reshape(out, (N, C, H, W))
    # TODO(synk): add an H-tiled halo path (2*(b_size[0]//2) halo rows,
    # channel-mean accumulated in VMEM scratch over an "arbitrary" grid axis,
    # global max via a finalize pass) gated on
    # pltpu.get_tpu_info().vmem_capacity_bytes for production shapes whose
    # per-image block exceeds v7x's 64 MiB VMEM.
    # TODO(synk): for l1/l2 on large H, W (>= ~128), offload the separable
    # window sums to the idle MXU as banded (W, W)/(H, H) matmuls instead of
    # the roll+mask VALU/XLU path.


def _reference(x, b_type="linf", b_size=(3, 3), sigma=1.0):
    """Plain-JAX reference mirroring the torch forward, for validation."""
    if isinstance(b_size, int):
        b_size = (b_size, b_size)
    ph, pw = b_size[0] // 2, b_size[1] // 2
    N, C, H, W = x.shape
    xp = jnp.pad(x, ((0, 0), (0, 0), (ph, ph), (pw, pw)))
    src = jnp.abs(xp) if b_type in ("linf", "l1") else xp * xp
    sf = None
    for dy in range(b_size[0]):
        for dx in range(b_size[1]):
            win = src[:, :, dy:dy + H, dx:dx + W]
            if sf is None:
                sf = win
            elif b_type == "linf":
                sf = jnp.maximum(sf, win)
            else:
                sf = sf + win
    if b_type == "l2":
        sf = jnp.sqrt(sf)
    sf = jnp.mean(sf, axis=1, keepdims=True)
    divisor = sigma * jnp.max(sf, axis=(2, 3), keepdims=True) \
        + (1.0 - sigma) * sf + 1e-07
    return x / divisor


if __name__ == "__main__":
    key = jax.random.PRNGKey(0)
    # Small shapes consistent with the module: N=2, C=4, H=W=16.
    x = jax.random.normal(key, (2, 4, 16, 16), dtype=jnp.float32)

    ok = True
    for b_type in ("linf", "l1", "l2"):
        for sigma in (1.0, 0.5):
            out = divisive_normalization_2d(x, b_type=b_type, b_size=(3, 3),
                                            sigma=sigma, alpha=0.0)
            out = jax.block_until_ready(out)
            ref = _reference(x, b_type=b_type, b_size=(3, 3), sigma=sigma)
            if not jnp.allclose(out, ref, atol=1e-5, rtol=1e-5):
                ok = False

    print("KERNEL_OK" if ok else "KERNEL_MISMATCH")
</pallas_src>

<mosaic_0001>
module attributes {stable_mosaic.version = 11 : i64} {
  func.func @_dn_kernel(%arg0: i32, %arg1: memref<4x1x256xf32, #tpu.memory_space<vmem>>, %arg2: memref<1x8x256xf32, #tpu.memory_space<vmem>>, %arg3: memref<1x4x256xf32, #tpu.memory_space<vmem>>) attributes {dimension_semantics = [#tpu.dimension_semantics<parallel>], iteration_bounds = array<i64: 2>, scalar_prefetch = 0 : i64, scratch_operands = 0 : i64, tpu.core_type = #tpu.core_type<tc>, window_params = [{pipeline_mode = #tpu.pipeline_mode<synchronous>, transform_indices = @transform_0, window_bounds = array<i64: 4, 1, 256>}, {transform_indices = @transform_1, window_bounds = array<i64: 1, 8, 256>}, {transform_indices = @transform_2, window_bounds = array<i64: 1, 4, 256>}]} {
    %c0 = arith.constant 0 : index
    %c0_0 = arith.constant 0 : index
    %c0_1 = arith.constant 0 : index
    %0 = vector.load %arg2[%c0, %c0_0, %c0_1] : memref<1x8x256xf32, #tpu.memory_space<vmem>>, vector<1x8x256xf32>
    %1 = math.absf %0 : vector<1x8x256xf32>
    %c0_2 = arith.constant 0 : index
    %c0_3 = arith.constant 0 : index
    %c0_4 = arith.constant 0 : index
    %2 = vector.load %arg1[%c0_2, %c0_3, %c0_4] : memref<4x1x256xf32, #tpu.memory_space<vmem>>, vector<1x1x256xf32>
    %3 = vector.shape_cast %2 : vector<1x1x256xf32> to vector<1x256xf32>
    %c1_i32 = arith.constant 1 : i32
    %4 = tpu.dynamic_rotate %1 by %c1_i32 dim 2 : vector<1x8x256xf32>, i32 -> vector<1x8x256xf32>
    %5 = vector.shape_cast %3 : vector<1x256xf32> to vector<1x1x256xf32>
    %6 = vector.broadcast %5 : vector<1x1x256xf32> to vector<1x8x256xf32>
    %7 = arith.mulf %4, %6 : vector<1x8x256xf32>
    %8 = arith.maximumf %1, %7 : vector<1x8x256xf32>
    %c1 = arith.constant 1 : index
    %c0_5 = arith.constant 0 : index
    %c0_6 = arith.constant 0 : index
    %9 = vector.load %arg1[%c1, %c0_5, %c0_6] : memref<4x1x256xf32, #tpu.memory_space<vmem>>, vector<1x1x256xf32>
    %10 = vector.shape_cast %9 : vector<1x1x256xf32> to vector<1x256xf32>
    %c255_i32 = arith.constant 255 : i32
    %11 = tpu.dynamic_rotate %1 by %c255_i32 dim 2 : vector<1x8x256xf32>, i32 -> vector<1x8x256xf32>
    %12 = vector.shape_cast %10 : vector<1x256xf32> to vector<1x1x256xf32>
    %13 = vector.broadcast %12 : vector<1x1x256xf32> to vector<1x8x256xf32>
    %14 = arith.mulf %11, %13 : vector<1x8x256xf32>
    %15 = arith.maximumf %8, %14 : vector<1x8x256xf32>
    %c2 = arith.constant 2 : index
    %c0_7 = arith.constant 0 : index
    %c0_8 = arith.constant 0 : index
    %16 = vector.load %arg1[%c2, %c0_7, %c0_8] : memref<4x1x256xf32, #tpu.memory_space<vmem>>, vector<1x1x256xf32>
    %17 = vector.shape_cast %16 : vector<1x1x256xf32> to vector<1x256xf32>
    %c16_i32 = arith.constant 16 : i32
    %18 = tpu.dynamic_rotate %15 by %c16_i32 dim 2 : vector<1x8x256xf32>, i32 -> vector<1x8x256xf32>
    %19 = vector.shape_cast %17 : vector<1x256xf32> to vector<1x1x256xf32>
    %20 = vector.broadcast %19 : vector<1x1x256xf32> to vector<1x8x256xf32>
    %21 = arith.mulf %18, %20 : vector<1x8x256xf32>
    %22 = arith.maximumf %15, %21 : vector<1x8x256xf32>
    %c3 = arith.constant 3 : index
    %c0_9 = arith.constant 0 : index
    %c0_10 = arith.constant 0 : index
    %23 = vector.load %arg1[%c3, %c0_9, %c0_10] : memref<4x1x256xf32, #tpu.memory_space<vmem>>, vector<1x1x256xf32>
    %24 = vector.shape_cast %23 : vector<1x1x256xf32> to vector<1x256xf32>
    %c240_i32 = arith.constant 240 : i32
    %25 = tpu.dynamic_rotate %15 by %c240_i32 dim 2 : vector<1x8x256xf32>, i32 -> vector<1x8x256xf32>
    %26 = vector.shape_cast %24 : vector<1x256xf32> to vector<1x1x256xf32>
    %27 = vector.broadcast %26 : vector<1x1x256xf32> to vector<1x8x256xf32>
    %28 = arith.mulf %25, %27 : vector<1x8x256xf32>
    %29 = arith.maximumf %22, %28 : vector<1x8x256xf32>
    %cst = arith.constant dense<0.000000e+00> : vector<1x256xf32>
    %30 = vector.multi_reduction <add>, %29, %cst [1] : vector<1x8x256xf32> to vector<1x256xf32>
    %31 = vector.shape_cast %30 : vector<1x256xf32> to vector<1x1x256xf32>
    %cst_11 = arith.constant 2.500000e-01 : f32
    %32 = vector.broadcast %cst_11 : f32 to vector<1x1x256xf32>
    %33 = arith.mulf %31, %32 : vector<1x1x256xf32>
    %cst_12 = arith.constant dense<0xFF800000> : vector<1x1xf32>
    %34 = vector.multi_reduction <maximumf>, %33, %cst_12 [2] : vector<1x1x256xf32> to vector<1x1xf32>
    %35 = vector.shape_cast %34 : vector<1x1xf32> to vector<1x1x1xf32>
    %cst_13 = arith.constant 1.000000e+00 : f32
    %36 = vector.broadcast %cst_13 : f32 to vector<1x1x1xf32>
    %37 = arith.mulf %36, %35 : vector<1x1x1xf32>
    %cst_14 = arith.constant 0.000000e+00 : f32
    %38 = vector.broadcast %cst_14 : f32 to vector<1x1x256xf32>
    %39 = arith.mulf %38, %33 : vector<1x1x256xf32>
    %40 = vector.broadcast %37 : vector<1x1x1xf32> to vector<1x1x256xf32>
    %41 = arith.addf %40, %39 : vector<1x1x256xf32>
    %cst_15 = arith.constant 1.000000e-07 : f32
    %42 = vector.broadcast %cst_15 : f32 to vector<1x1x256xf32>
    %43 = arith.addf %41, %42 : vector<1x1x256xf32>
    %44 = tpu.reciprocal %43 {approx = true} : vector<1x1x256xf32> -> vector<1x1x256xf32>
    %45 = arith.mulf %43, %44 : vector<1x1x256xf32>
    %cst_16 = arith.constant 2.000000e+00 : f32
    %46 = vector.broadcast %cst_16 : f32 to vector<1x1x256xf32>
    %47 = arith.subf %46, %45 : vector<1x1x256xf32>
    %48 = arith.mulf %44, %47 : vector<1x1x256xf32>
    %c0_17 = arith.constant 0 : index
    %c0_18 = arith.constant 0 : index
    %c0_19 = arith.constant 0 : index
    %49 = vector.load %arg2[%c0_17, %c0_18, %c0_19] : memref<1x8x256xf32, #tpu.memory_space<vmem>>, vector<1x8x256xf32>
    %50 = vector.extract_strided_slice %49 {offsets = [0, 0, 0], sizes = [1, 4, 256], strides = [1, 1, 1]} : vector<1x8x256xf32> to vector<1x4x256xf32>
    %51 = vector.broadcast %48 : vector<1x1x256xf32> to vector<1x4x256xf32>
    %52 = arith.mulf %50, %51 : vector<1x4x256xf32>
    %c0_20 = arith.constant 0 : index
    %c0_21 = arith.constant 0 : index
    %c0_22 = arith.constant 0 : index
    %53 = vector.load %arg3[%c0_20, %c0_21, %c0_22] : memref<1x4x256xf32, #tpu.memory_space<vmem>>, vector<1x4x256xf32>
    tpu.vector_store %arg3[%c0_20, %c0_21, %c0_22], %52 {strides = array<i32>} : memref<1x4x256xf32, #tpu.memory_space<vmem>>, vector<1x4x256xf32>,
    return
  }
  func.func @transform_0(%arg0: i32) -> (i32, i32, i32) {
    %c0_i32 = arith.constant 0 : i32
    %c0_i32_0 = arith.constant 0 : i32
    %c0_i32_1 = arith.constant 0 : i32
    %c0_i32_2 = arith.constant 0 : i32
    return %c0_i32, %c0_i32_0, %c0_i32_1 : i32, i32, i32
  }
  func.func @transform_1(%arg0: i32) -> (i32, i32, i32) {
    %c0_i32 = arith.constant 0 : i32
    %c0_i32_0 = arith.constant 0 : i32
    %c0_i32_1 = arith.constant 0 : i32
    return %arg0, %c0_i32, %c0_i32_0 : i32, i32, i32
  }
  func.func @transform_2(%arg0: i32) -> (i32, i32, i32) {
    %c0_i32 = arith.constant 0 : i32
    %c0_i32_0 = arith.constant 0 : i32
    %c0_i32_1 = arith.constant 0 : i32
    return %arg0, %c0_i32, %c0_i32_0 : i32, i32, i32
  }
}

</mosaic_0001>

<llo_original>
// kernel: tpu_custom_call.1
$region0: #{tpu_custom_call.1}
  #allocation0 [shape = 'u32[]', space=smem, size = 0x4, offset = 0x4, fixed_abs, tag = 'smem constant byte address 0x4 - core index']
  #allocation1 [shape = 'u32[144,128]{1,0:T(1,128)}', space=vmem, size = 0x12000, scoped, tag = 'internal scratch']
  %s0 = inlined_call_operand.hbm [shape: f32[4,1,256], index: 0, kind: input, shape index: {}]
  %s1 = inlined_call_operand.hbm [shape: f32[2,8,256], index: 1, kind: input, shape index: {}]
  %s2 = inlined_call_operand.hbm [shape: f32[2,4,256], index: 2, kind: output, shape index: {}]
  %s3 = sld [smem:[#allocation0]]
  $region49: #{tpu_custom_call.1} parent=0
    _
  %s5 = ssub.s32 1, %s3
  %s6 = scalar_select 0, %s5, %s3
  $region1: #{tpu_custom_call.1} parent=0
    #allocation2 [shape = 'u8[4096]{0}', space=vmem, size = 0x1000, scoped, tag = 'input window, operand 0, single buffered']
    #allocation3 [shape = 's32[2]{0}', space=sflag, size = 0x8, scoped, tag = 'scoped memory for tpu_custom_call.1']
    #allocation4 [shape = 's32[2]{0}', space=sflag, size = 0x8, scoped, tag = 'scoped memory for tpu_custom_call.1']
    #allocation5 [shape = 'u8[16384]{0}', space=vmem, size = 0x4000, scoped, tag = 'input window, operand 1']
    #allocation6 [shape = 's32[2]{0}', space=sflag, size = 0x8, scoped, tag = 'scoped memory for tpu_custom_call.1']
    #allocation7 [shape = 'u8[8192]{0}', space=vmem, size = 0x2000, scoped, tag = 'output window, operand 0']
    %7 = vsyncpa [#allocation3], 0
    %8 = vsyncpa [#allocation6], 0
    %s9 = scalar_lea.sflag [#allocation6], 1
    %10 = vsyncpa %s9, 0
    %11 = vsyncpa [#allocation4], 0
    %s12 = scalar_lea.sflag [#allocation4], 1
    %13 = vsyncpa %s12, 0
    loop: start=0, step=1, limit=4
    $region2: #{tpu_custom_call.1} parent=1 // loop_pre_header
      _
    $region3: #{tpu_custom_call.1} parent=1 // loop_header
      %s15 = sphi 0, %s19
      %p16 = scmp.ge.s32.totalorder %s15, 4
      %s23 = sphi 0, %s23
      %s25 = sphi 0, %s23
      %s26 = sphi 0, %s25
      %s40 = sphi 0, %s26
      %s46 = sphi 0, %s48
      %s49 = sphi 0, %s46
      %s50 = sphi 0, %s49
      %s66 = sphi 0, %s50
      %s72 = sphi 0, %s74
      %s75 = sphi 0, %s72
      %s76 = sphi 0, %s75
      %s92 = sphi 0, %s76
    $region4: #{tpu_custom_call.1} parent=1 // loop_header_branch
      %18 = sbr.rel (%p16) target = $region8
    $region5: #{tpu_custom_call.1} parent=1 // loop_body
      %s20 = ssub.s32 %s15, 1
      %s21 = ssub.s32 %s15, 2
      %s22 = sadd.s32 %s15, 1
      %s24 = sadd.s32 %s23, 1
      %p27 = scmp.eq.s32.totalorder %s15, 1
      %p28 = scmp.ne.s32.totalorder %s23, %s25
      %p29 = scmp.eq.s32.totalorder %s15, 0
      %p30 = por %p28, %p29
      %p31 = scmp.ne.s32.totalorder %s23, %s25
      %p32 = scmp.eq.s32.totalorder %s20, 1
      %p33 = por %p31, %p32
      %p34 = scmp.ne.s32.totalorder %s25, %s26
      %p35 = scmp.eq.s32.totalorder %s20, 0
      %p36 = por %p34, %p35
      %p37 = scmp.ne.s32.totalorder %s25, %s26
      %p38 = scmp.eq.s32.totalorder %s21, 1
      %p39 = por %p37, %p38
      %p41 = scmp.ne.s32.totalorder %s26, %s40
      %p42 = scmp.eq.s32.totalorder %s21, 0
      %p43 = por %p41, %p42
      %s44 = ssub.s32 %s15, %s22
      %p45 = scmp.eq.s32.totalorder %s44, 0
      %s47 = sadd.s32 %s46, 1
      %s48 = scalar_select %p45, %s46, %s47
      %p51 = pneg %p45
      %p52 = scmp.eq.s32.totalorder %s15, 1
      %p53 = por %p51, %p52
      %p54 = scmp.ne.s32.totalorder %s46, %s49
      %p55 = scmp.eq.s32.totalorder %s15, 0
      %p56 = por %p54, %p55
      %p57 = scmp.ne.s32.totalorder %s46, %s49
      %p58 = scmp.eq.s32.totalorder %s20, 1
      %p59 = por %p57, %p58
      %p60 = scmp.ne.s32.totalorder %s49, %s50
      %p61 = scmp.eq.s32.totalorder %s20, 0
      %p62 = por %p60, %p61
      %p63 = scmp.ne.s32.totalorder %s49, %s50
      %p64 = scmp.eq.s32.totalorder %s21, 1
      %p65 = por %p63, %p64
      %p67 = scmp.ne.s32.totalorder %s50, %s66
      %p68 = scmp.eq.s32.totalorder %s21, 0
      %p69 = por %p67, %p68
      %s70 = ssub.s32 %s15, %s22
      %p71 = scmp.eq.s32.totalorder %s70, 0
      %s73 = sadd.s32 %s72, 1
      %s74 = scalar_select %p71, %s72, %s73
      %p77 = pneg %p71
      %p78 = scmp.eq.s32.totalorder %s15, 1
      %p79 = por %p77, %p78
      %p80 = scmp.ne.s32.totalorder %s72, %s75
      %p81 = scmp.eq.s32.totalorder %s15, 0
      %p82 = por %p80, %p81
      %p83 = scmp.ne.s32.totalorder %s72, %s75
      %p84 = scmp.eq.s32.totalorder %s20, 1
      %p85 = por %p83, %p84
      %p86 = scmp.ne.s32.totalorder %s75, %s76
      %p87 = scmp.eq.s32.totalorder %s20, 0
      %p88 = por %p86, %p87
      %p89 = scmp.ne.s32.totalorder %s75, %s76
      %p90 = scmp.eq.s32.totalorder %s21, 1
      %p91 = por %p89, %p90
      %p93 = scmp.ne.s32.totalorder %s76, %s92
      %p94 = scmp.eq.s32.totalorder %s21, 0
      %p95 = por %p93, %p94
      %p96 = scmp.le.s32.totalorder 1, %s15
      %p97 = scmp.lt.s32.totalorder %s15, 3
      %p98 = pnand %p96, %p97
      %p99 = pneg %p98
      // Predicated region
      $region9: #{tpu_custom_call.1} parent=5 // pred_check
        _
      $region10: #{tpu_custom_call.1} parent=5 // pred_check_branch
        %101 = sbr.rel (%p98) target = $region12
      $region11: #{tpu_custom_call.1} parent=5 // pred_region
        %s102 = ssub.s32 %s15, 1
        // Predicated region
        $region13: #{tpu_custom_call.1} parent=11 // pred_check
          %p103 = pneg %p36
        $region14: #{tpu_custom_call.1} parent=11 // pred_check_branch
          %105 = sbr.rel (%p103) target = $region16
        $region15: #{tpu_custom_call.1} parent=11 // pred_region
          %s107 = ssub.s32 128, 128
          %108 = vsyncadd [#allocation3], %s107
          %s109 = sshll.u32 [#allocation2], 4
          %s110 = int_to_ptr.vmem [resolvable:$true] %s109
          %115 = dma.hbm_to_vmem [thread:$0]  %s0, 128, %s110, [#allocation3], 32, 32, 2
        $region16: #{tpu_custom_call.1} parent=11 // pred_fallthru
          _
      $region12: #{tpu_custom_call.1} parent=5 // pred_fallthru
        _
      %p116 = scmp.lt.s32.totalorder %s15, 2
      // Predicated region
      $region17: #{tpu_custom_call.1} parent=5 // pred_check
        %p117 = pneg %p116
      $region18: #{tpu_custom_call.1} parent=5 // pred_check_branch
        %119 = sbr.rel (%p117) target = $region20
      $region19: #{tpu_custom_call.1} parent=5 // pred_region
        // Predicated region
        $region21: #{tpu_custom_call.1} parent=19 // pred_check
          %p120 = pneg %p56
        $region22: #{tpu_custom_call.1} parent=19 // pred_check_branch
          %122 = sbr.rel (%p120) target = $region24
        $region23: #{tpu_custom_call.1} parent=19 // pred_region
          %s123 = sand.u32 %s46, 1
          %s124 = scalar_lea.sflag [#allocation6], %s123
          %s125 = sand.u32 %s46, 1
          %s126 = smul.addr %s125, 16
          %s127 = scalar_lea.vmem [#allocation5], %s126
          %s129 = ssub.s32 256, 256
          %130 = vsyncadd %s124, %s129
          %s131 = smul.addr %s15, 2
          %s132 = smul.addr %s131, 128
          %s133 = scalar_lea.hbm %s1, %s132
          %s135 = sshll.u32 %s127, 4
          %s136 = int_to_ptr.vmem [resolvable:$true] %s135
          %138 = dma.hbm_to_vmem [thread:$0]  %s133, 256, %s136, %s124
        $region24: #{tpu_custom_call.1} parent=19 // pred_fallthru
          _
      $region20: #{tpu_custom_call.1} parent=5 // pred_fallthru
        _
      %p139 = scmp.le.s32.totalorder 1, %s15
      %p140 = scmp.lt.s32.totalorder %s15, 3
      %p141 = pnand %p139, %p140
      %p142 = pneg %p141
      // Predicated region
      $region25: #{tpu_custom_call.1} parent=5 // pred_check
        _
      $region26: #{tpu_custom_call.1} parent=5 // pred_check_branch
        %144 = sbr.rel (%p141) target = $region28
      $region27: #{tpu_custom_call.1} parent=5 // pred_region
        %s145 = ssub.s32 %s15, 1
        // Predicated region
        $region29: #{tpu_custom_call.1} parent=27 // pred_check
          %p146 = pneg %p36
        $region30: #{tpu_custom_call.1} parent=27 // pred_check_branch
          %148 = sbr.rel (%p146) target = $region32
        $region31: #{tpu_custom_call.1} parent=27 // pred_region
          %149 = dma.done [#allocation3], 128
        $region32: #{tpu_custom_call.1} parent=27 // pred_fallthru
          _
        %s150 = sand.u32 %s49, 1
        %s151 = scalar_lea.sflag [#allocation6], %s150
        %s152 = sand.u32 %s49, 1
        %s153 = smul.addr %s152, 16
        %s154 = scalar_lea.vmem [#allocation5], %s153
        // Predicated region
        $region33: #{tpu_custom_call.1} parent=27 // pred_check
          %p155 = pneg %p62
        $region34: #{tpu_custom_call.1} parent=27 // pred_check_branch
          %157 = sbr.rel (%p155) target = $region36
        $region35: #{tpu_custom_call.1} parent=27 // pred_region
          %158 = dma.done %s151, 256
        $region36: #{tpu_custom_call.1} parent=27 // pred_fallthru
          _
        %p159 = pneg %p36
        %p160 = pneg %p33
        %s161 = sand.u32 %s49, 1
        %s162 = scalar_lea.sflag [#allocation6], %s161
        %s163 = sand.u32 %s49, 1
        %s164 = smul.addr %s163, 16
        %s165 = scalar_lea.vmem [#allocation5], %s164
        %p166 = pneg %p62
        %p167 = pneg %p59
        %p168 = pneg %p88
        %p169 = pneg %p85
        %s170 = sand.u32 %s75, 1
        %s171 = scalar_lea.sflag [#allocation4], %s170
        %s172 = sand.u32 %s75, 1
        %s173 = smul.addr %s172, 8
        %s174 = scalar_lea.vmem [#allocation7], %s173
        %v175 = vld [vmem:[%s154] sm:$0xff]
        %v176 = vld [vmem:[%s154 + $0x8] sm:$0xff]
        %v177 = vand.u32 2147483647, %v175
        %v178 = vand.u32 2147483647, %v176
        %v179 = vld [vmem:[#allocation2] sm:$0x3]
        %180 = vrot.lane.b32.xlu0 %v177, 1
        %v181 = vpop.permute.xlu0 %180
        %182 = vrot.lane.b32.xlu0 %v178, 1
        %v183 = vpop.permute.xlu0 %182
        %v184 = vlaneseq
        %v185 = vand.u32 %v184, 127
        %vm186 = vcmp.lt.s32.totalorder %v185, 1
        %v187 = vsel %vm186, %v181, %v183
        %v188 = vsel %vm186, %v183, %v181
        %v190 = vlaneseq
        %v191 = vshrl.u32 %v190, 7
        %v192 = vsub.s32 0, %v191
        %v193 = vrot.slane %v179, %v192
        %v194 = vlaneseq
        %v195 = vshrl.u32 %v194, 7
        %v196 = vsub.s32 1, %v195
        %v197 = vrot.slane %v179, %v196
        %v200 = vmul.f32 %v188, %v193
        %v201 = vmul.f32 %v187, %v197
        %v202 = vmax.f32 %v177, %v200
        %v203 = vmax.f32 %v178, %v201
        %s204 = scalar_lea.vmem [#allocation2], 2
        %v205 = vld [vmem:[%s204] sm:$0x3]
        %206 = vrot.lane.b32.xlu0 %v177, 127
        %v207 = vpop.permute.xlu0 %206
        %208 = vrot.lane.b32.xlu0 %v178, 127
        %v209 = vpop.permute.xlu0 %208
        %vm210 = vcmp.lt.s32.totalorder %v185, 127
        %v211 = vsel %vm210, %v207, %v209
        %v212 = vsel %vm210, %v209, %v207
        %v214 = vlaneseq
        %v215 = vshrl.u32 %v214, 7
        %v216 = vsub.s32 0, %v215
        %v217 = vrot.slane %v205, %v216
        %v218 = vlaneseq
        %v219 = vshrl.u32 %v218, 7
        %v220 = vsub.s32 1, %v219
        %v221 = vrot.slane %v205, %v220
        %v224 = vmul.f32 %v211, %v217
        %v225 = vmul.f32 %v212, %v221
        %v226 = vmax.f32 %v202, %v224
        %v227 = vmax.f32 %v203, %v225
        %s228 = scalar_lea.vmem [#allocation2], 4
        %v229 = vld [vmem:[%s228] sm:$0x3]
        %230 = vrot.lane.b32.xlu0 %v226, 16
        %v231 = vpop.permute.xlu0 %230
        %232 = vrot.lane.b32.xlu0 %v227, 16
        %v233 = vpop.permute.xlu0 %232
        %vm234 = vcmp.lt.s32.totalorder %v185, 16
        %v235 = vsel %vm234, %v231, %v233
        %v236 = vsel %vm234, %v233, %v231
        %v238 = vlaneseq
        %v239 = vshrl.u32 %v238, 7
        %v240 = vsub.s32 0, %v239
        %v241 = vrot.slane %v229, %v240
        %v242 = vlaneseq
        %v243 = vshrl.u32 %v242, 7
        %v244 = vsub.s32 1, %v243
        %v245 = vrot.slane %v229, %v244
        %v248 = vmul.f32 %v236, %v241
        %v249 = vmul.f32 %v235, %v245
        %v250 = vmax.f32 %v226, %v248
        %v251 = vmax.f32 %v227, %v249
        %s252 = scalar_lea.vmem [#allocation2], 6
        %v253 = vld [vmem:[%s252] sm:$0x3]
        %254 = vrot.lane.b32.xlu0 %v226, 112
        %v255 = vpop.permute.xlu0 %254
        %256 = vrot.lane.b32.xlu0 %v227, 112
        %v257 = vpop.permute.xlu0 %256
        %vm258 = vcmp.lt.s32.totalorder %v185, 112
        %v259 = vsel %vm258, %v255, %v257
        %v260 = vsel %vm258, %v257, %v255
        %v262 = vlaneseq
        %v263 = vshrl.u32 %v262, 7
        %v264 = vsub.s32 0, %v263
        %v265 = vrot.slane %v253, %v264
        %v266 = vlaneseq
        %v267 = vshrl.u32 %v266, 7
        %v268 = vsub.s32 1, %v267
        %v269 = vrot.slane %v253, %v268
        %v272 = vmul.f32 %v259, %v265
        %v273 = vmul.f32 %v260, %v269
        %v274 = vmax.f32 %v250, %v272
        %v275 = vmax.f32 %v251, %v273
        %v276 = vrot.slane %v274, 4
        %v277 = vadd.f32 %v274, %v276
        %v278 = vrot.slane %v277, 2
        %v279 = vadd.f32 %v277, %v278
        %v280 = vrot.slane %v279, 1
        %v281 = vadd.f32 %v279, %v280
        %v282 = vrot.slane %v275, 4
        %v283 = vadd.f32 %v275, %v282
        %v284 = vrot.slane %v283, 2
        %v285 = vadd.f32 %v283, %v284
        %v286 = vrot.slane %v285, 1
        %v287 = vadd.f32 %v285, %v286
        %v288 = vmul.f32 %v281, 0.25
        %v289 = vmul.f32 %v287, 0.25
        %v290 = vmax.f32 %v288, %v289
        %291 = vmax.xlane.f32.xlu0 %v290
        %v292 = vpop.xlane.xlu0 %291
        %v293 = vmul.f32 %v288, 0.0
        %v294 = vmul.f32 %v289, 0.0
        %v295 = vadd.f32 %v292, %v293
        %v296 = vadd.f32 %v292, %v294
        %v297 = vadd.f32 %v295, 1e-07
        %v298 = vadd.f32 %v296, 1e-07
        %v299 = vrcp.pop %v297
        %v300 = vrcp.pop %v298
        %v301 = vmul.f32 %v297, %v299
        %v302 = vmul.f32 %v298, %v300
        %v303 = vsub.f32 2.0, %v301
        %v304 = vsub.f32 2.0, %v302
        %v305 = vmul.f32 %v299, %v303
        %v306 = vmul.f32 %v300, %v304
        %v307 = vmul.f32 %v175, %v305
        %v308 = vmul.f32 %v176, %v306
        %v311 = vcombine.low %v307, %v308
        %313 = vst [vmem:[%s174] sm:$0xff] %v311
        %s314 = sand.u32 %s75, 1
        %s315 = scalar_lea.sflag [#allocation4], %s314
        %s316 = sand.u32 %s75, 1
        %s317 = smul.addr %s316, 8
        %s318 = scalar_lea.vmem [#allocation7], %s317
        // Predicated region
        $region37: #{tpu_custom_call.1} parent=27 // pred_check
          %p319 = pneg %p85
        $region38: #{tpu_custom_call.1} parent=27 // pred_check_branch
          %321 = sbr.rel (%p319) target = $region40
        $region39: #{tpu_custom_call.1} parent=27 // pred_region
          %s323 = ssub.s32 128, 128
          %324 = vsyncadd %s315, %s323
          %s325 = smul.addr %s20, 2
          %s326 = smul.addr %s325, 64
          %s327 = scalar_lea.hbm %s2, %s326
          %s329 = sshll.u32 %s318, 4
          %s330 = int_to_ptr.vmem [resolvable:$true] %s329
          %332 = dma.vmem_to_hbm [thread:$0]  %s330, 128, %s327, %s315
        $region40: #{tpu_custom_call.1} parent=27 // pred_fallthru
          _
      $region28: #{tpu_custom_call.1} parent=5 // pred_fallthru
        _
      %p333 = scmp.le.s32.totalorder 2, %s15
      // Predicated region
      $region41: #{tpu_custom_call.1} parent=5 // pred_check
        %p334 = pneg %p333
      $region42: #{tpu_custom_call.1} parent=5 // pred_check_branch
        %336 = sbr.rel (%p334) target = $region44
      $region43: #{tpu_custom_call.1} parent=5 // pred_region
        %s337 = ssub.s32 %s15, 2
        // Predicated region
        $region45: #{tpu_custom_call.1} parent=43 // pred_check
          %p338 = pneg %p91
        $region46: #{tpu_custom_call.1} parent=43 // pred_check_branch
          %340 = sbr.rel (%p338) target = $region48
        $region47: #{tpu_custom_call.1} parent=43 // pred_region
          %s341 = sand.u32 %s76, 1
          %s342 = scalar_lea.sflag [#allocation4], %s341
          %s343 = sand.u32 %s76, 1
          %s344 = smul.addr %s343, 8
          %s345 = scalar_lea.vmem [#allocation7], %s344
          %346 = dma.done %s342, 128
        $region48: #{tpu_custom_call.1} parent=43 // pred_fallthru
          _
      $region44: #{tpu_custom_call.1} parent=5 // pred_fallthru
        _
    $region6: #{tpu_custom_call.1} parent=1 // loop_footer
      %s19 = sadd.s32 1, %s15
    $region7: #{tpu_custom_call.1} parent=1 // loop_footer_branch
      %14 = sbr.rel target = $region3
    $region8: #{tpu_custom_call.1} parent=1 // loop_exit
      _
    %347 = vsyncpa [#allocation3], 1
    %s348 = scalar_lea.sflag [#allocation3], 1
    %349 = vsyncpa %s348, 1
    %350 = vsyncpa [#allocation6], 1
    %s351 = scalar_lea.sflag [#allocation6], 1
    %352 = vsyncpa %s351, 1
    %353 = vsyncpa [#allocation4], 1
    %s354 = scalar_lea.sflag [#allocation4], 1
    %355 = vsyncpa %s354, 1

</llo_original>
